<compile_context>
chip_gen: v7x
topology: tpu7x:2x2x1
jax: 0.10.0
libtpu: 0.0.40
codegen_flags: <defaults>
</compile_context>

<pallas_src>
import functools

import jax
import jax.numpy as jnp
from jax.experimental import pallas as pl
from jax.experimental.pallas import tpu as pltpu


# ----------------------------------------------------------------------------- utils

def _vmem_capacity_bytes():
    try:
        return int(pltpu.get_tpu_info().vmem_capacity_bytes)
    except Exception:
        return 64 * 1024 * 1024  # conservative (v7x-sized) default


def _choose_bt(batch, bytes_per_b, budget):
    """Batch elements per grid step.

    Only divisors of `batch` are considered (so no batch padding is ever needed).
    Prefer the largest tile that still leaves an even grid-step count >= 4
    (megacore balance + pipeline overlap), then >= 2 even, then >= 2.
    """
    divs = [d for d in range(1, batch + 1) if batch % d == 0]
    fits = [d for d in divs if d * bytes_per_b <= budget] or [1]

    def steps(d):
        return batch // d

    for cond in (lambda d: steps(d) >= 4 and steps(d) % 2 == 0,
                 lambda d: steps(d) >= 2 and steps(d) % 2 == 0,
                 lambda d: steps(d) >= 2):
        ok = [d for d in fits if cond(d)]
        if ok:
            return max(ok)
    return max(fits)


def _mlp_gate(avg, mx, w1_ref, b1_ref, w2_ref, b2_ref):
    """Two tiny per-path MLPs (avg path / max path), summed after layer 2 + sigmoid."""
    ha = jnp.maximum(
        jnp.dot(avg, w1_ref[0], preferred_element_type=jnp.float32) + b1_ref[0], 0.0)
    hm = jnp.maximum(
        jnp.dot(mx, w1_ref[1], preferred_element_type=jnp.float32) + b1_ref[1], 0.0)
    pre = (jnp.dot(ha, w2_ref[0], preferred_element_type=jnp.float32)
           + jnp.dot(hm, w2_ref[1], preferred_element_type=jnp.float32)
           + b2_ref[...])
    return jax.nn.sigmoid(pre)


# ----------------------------------------------------------------------------- kernels

def _carm_fused_kernel(x_ref, w1_ref, b1_ref, w2_ref, b2_ref, o_ref, *, hw):
    """Single-pass path: one whole (Bt, C, HW) slab per grid step."""
    xf = x_ref[...].astype(jnp.float32)                        # (Bt, C, HW)
    avg = jnp.sum(xf, axis=2) * jnp.float32(1.0 / hw)          # (Bt, C)  exact mean
    mx = jnp.max(xf, axis=2)                                   # (Bt, C)  Mosaic masks tail
    gate = _mlp_gate(avg, mx, w1_ref, b1_ref, w2_ref, b2_ref)  # (Bt, C)
    o_ref[...] = (xf * gate[:, :, None]).astype(o_ref.dtype)


def _carm_pool_gate_kernel(x_ref, w1_ref, b1_ref, w2_ref, b2_ref, gate_ref,
                           sum_sc, max_sc, *, hw, hwt, ragged):
    """Two-pass path, pass 1: HW-tiled pooling reduction, gate at the last HW tile."""
    h = pl.program_id(1)

    @pl.when(h == 0)
    def _():
        sum_sc[...] = jnp.zeros_like(sum_sc)
        max_sc[...] = jnp.full_like(max_sc, -jnp.inf)

    xf = x_ref[...].astype(jnp.float32)                        # (1, C, hwt)
    if ragged:
        lane = jax.lax.broadcasted_iota(jnp.int32, xf.shape, 2) + h * hwt
        valid = lane < hw
        xs = jnp.where(valid, xf, 0.0)
        xm = jnp.where(valid, xf, -jnp.inf)
    else:
        xs = xf
        xm = xf
    sum_sc[...] += jnp.sum(xs, axis=2)
    max_sc[...] = jnp.maximum(max_sc[...], jnp.max(xm, axis=2))

    @pl.when(h == pl.num_programs(1) - 1)
    def _():
        avg = sum_sc[...] * jnp.float32(1.0 / hw)              # (1, C)
        mx = max_sc[...]
        gate = _mlp_gate(avg, mx, w1_ref, b1_ref, w2_ref, b2_ref)
        gate_ref[...] = gate[:, :, None]                       # (1, C, 1)


def _carm_rescale_kernel(x_ref, gate_ref, o_ref):
    """Two-pass path, pass 2: channel-gate rescale of each HW tile."""
    xf = x_ref[...].astype(jnp.float32)                        # (1, C, hwt)
    o_ref[...] = (xf * gate_ref[...]).astype(o_ref.dtype)      # gate (1, C, 1) broadcasts


# ----------------------------------------------------------------------------- wrapper

def carm_forward(x_nchw, params, *, slab_budget=None, vmem_limit=None):
    """x_nchw: (B, C, H, W). params: torch-convention Linear weights (see init_params)."""
    B, C, H, W = x_nchw.shape
    HW = H * W
    dtype = x_nchw.dtype
    itemsize = jnp.dtype(dtype).itemsize
    Cr = params["w1a"].shape[0]

    # ---- generation-aware VMEM budgeting ----
    vmem_cap = _vmem_capacity_bytes()
    if slab_budget is None:
        slab_budget = (4 * 1024 * 1024 if vmem_cap <= 64 * 1024 * 1024
                       else 8 * 1024 * 1024)
    if vmem_limit is None:
        vmem_limit = max(32 * 1024 * 1024, min(int(vmem_cap * 0.6), 96 * 1024 * 1024))

    # no spatial/batch padding: Mosaic masks ragged lane tails in the reductions,
    # and Bt is always a divisor of B.
    x3 = x_nchw.reshape(B, C, HW)

    # ---- stack per-path weights once (torch Linear: y = x @ W.T + b) ----
    w1 = jnp.stack([params["w1a"].T, params["w1m"].T]).astype(jnp.float32)   # (2, C, Cr)
    b1 = jnp.stack([params["b1a"][None, :],
                    params["b1m"][None, :]]).astype(jnp.float32)             # (2, 1, Cr)
    w2 = jnp.stack([params["w2a"].T, params["w2m"].T]).astype(jnp.float32)   # (2, Cr, C)
    b2 = (params["b2a"] + params["b2m"])[None, :].astype(jnp.float32)        # (1, C)

    weight_specs = [
        pl.BlockSpec((2, C, Cr), lambda *idx: (0, 0, 0)),
        pl.BlockSpec((2, 1, Cr), lambda *idx: (0, 0, 0)),
        pl.BlockSpec((2, Cr, C), lambda *idx: (0, 0, 0)),
        pl.BlockSpec((1, C), lambda *idx: (0, 0)),
    ]
    weight_bytes = (w1.size + b1.size + w2.size + b2.size) * 4
    mlp_flops = B * 2 * (2 * C * Cr + 2 * Cr * C)

    slab_per_b = C * HW * itemsize
    use_two_pass = slab_per_b > slab_budget
    if use_two_pass:
        hwt = max(128, (slab_budget // (C * itemsize)) // 128 * 128)
        if hwt >= HW:
            use_two_pass = False  # only marginally over budget; single pass is fine

    if not use_two_pass:
        # -------- single-pass fused path --------
        Bt = _choose_bt(B, slab_per_b, slab_budget)
        grid = (B // Bt,)
        cost = pl.CostEstimate(
            flops=int(2 * B * C * HW + mlp_flops),
            transcendentals=int(B * C),
            bytes_accessed=int(2 * B * C * HW * itemsize + weight_bytes))

        out3 = pl.pallas_call(
            functools.partial(_carm_fused_kernel, hw=HW),
            out_shape=jax.ShapeDtypeStruct((B, C, HW), dtype),
            grid_spec=pltpu.PrefetchScalarGridSpec(
                num_scalar_prefetch=0,
                grid=grid,
                in_specs=[pl.BlockSpec((Bt, C, HW), lambda i: (i, 0, 0))] + weight_specs,
                out_specs=pl.BlockSpec((Bt, C, HW), lambda i: (i, 0, 0)),
            ),
            compiler_params=pltpu.CompilerParams(
                dimension_semantics=("parallel",),
                vmem_limit_bytes=int(vmem_limit)),
            cost_estimate=cost,
        )(x3, w1, b1, w2, b2)
        return out3.reshape(B, C, H, W)

    # -------- two-pass reduce-then-gate path (very large C*HW slabs) --------
    n_hw = pl.cdiv(HW, hwt)
    ragged = (HW % hwt) != 0

    # Pass 1: pooled stats + gate, HW axis is a trailing "arbitrary" reduction axis.
    gate = pl.pallas_call(
        functools.partial(_carm_pool_gate_kernel, hw=HW, hwt=hwt, ragged=ragged),
        out_shape=jax.ShapeDtypeStruct((B, C, 1), jnp.float32),
        grid_spec=pltpu.PrefetchScalarGridSpec(
            num_scalar_prefetch=0,
            grid=(B, n_hw),
            in_specs=[pl.BlockSpec((1, C, hwt), lambda b, h: (b, 0, h))] + weight_specs,
            out_specs=pl.BlockSpec((1, C, 1), lambda b, h: (b, 0, 0)),
            scratch_shapes=[pltpu.VMEM((1, C), jnp.float32),
                            pltpu.VMEM((1, C), jnp.float32)],
        ),
        compiler_params=pltpu.CompilerParams(
            dimension_semantics=("parallel", "arbitrary"),
            vmem_limit_bytes=int(vmem_limit)),
        cost_estimate=pl.CostEstimate(
            flops=int(B * C * HW + mlp_flops),
            transcendentals=int(B * C),
            bytes_accessed=int(B * C * HW * itemsize + weight_bytes)),
    )(x3, w1, b1, w2, b2)

    # Pass 2: rescale each HW tile by the per-channel gate.
    out3 = pl.pallas_call(
        _carm_rescale_kernel,
        out_shape=jax.ShapeDtypeStruct((B, C, HW), dtype),
        grid_spec=pltpu.PrefetchScalarGridSpec(
            num_scalar_prefetch=0,
            grid=(B, n_hw),
            in_specs=[pl.BlockSpec((1, C, hwt), lambda b, h: (b, 0, h)),
                      pl.BlockSpec((1, C, 1), lambda b, h: (b, 0, 0))],
            out_specs=pl.BlockSpec((1, C, hwt), lambda b, h: (b, 0, h)),
        ),
        compiler_params=pltpu.CompilerParams(
            dimension_semantics=("parallel", "parallel"),
            vmem_limit_bytes=int(vmem_limit)),
        cost_estimate=pl.CostEstimate(
            flops=int(B * C * HW),
            transcendentals=0,
            bytes_accessed=int(2 * B * C * HW * itemsize + B * C * 4)),
    )(x3, gate)
    return out3.reshape(B, C, H, W)


# ----------------------------------------------------------------------------- reference

def carm_reference(x_nchw, params):
    """Pure-JAX reference mirroring the PyTorch forward."""
    avg = jnp.mean(x_nchw, axis=(2, 3))            # (B, C)
    mx = jnp.max(x_nchw, axis=(2, 3))              # (B, C)

    def mlp(v, w1, b1, w2, b2):
        h = jnp.maximum(v @ w1.T + b1, 0.0)
        return h @ w2.T + b2

    avg_out = mlp(avg, params["w1a"], params["b1a"], params["w2a"], params["b2a"])
    max_out = mlp(mx, params["w1m"], params["b1m"], params["w2m"], params["b2m"])
    gate = jax.nn.sigmoid(avg_out + max_out)       # (B, C)
    return x_nchw * gate[:, :, None, None]


def init_params(key, in_planes, ratio=8):
    Cr = in_planes // ratio
    ks = jax.random.split(key, 8)

    def u(k, shape, fan_in):
        bound = 1.0 / jnp.sqrt(fan_in)
        return jax.random.uniform(k, shape, jnp.float32, -bound, bound)

    return {
        "w1a": u(ks[0], (Cr, in_planes), in_planes),
        "b1a": u(ks[1], (Cr,), in_planes),
        "w2a": u(ks[2], (in_planes, Cr), Cr),
        "b2a": u(ks[3], (in_planes,), Cr),
        "w1m": u(ks[4], (Cr, in_planes), in_planes),
        "b1m": u(ks[5], (Cr,), in_planes),
        "w2m": u(ks[6], (in_planes, Cr), Cr),
        "b2m": u(ks[7], (in_planes,), Cr),
    }


if __name__ == "__main__":
    key = jax.random.PRNGKey(0)
    kx, kp, kx2, kx3 = jax.random.split(key, 4)

    B, C = 2, 32                                     # in_planes=32, ratio=8 -> hidden=4
    params = init_params(kp, C, ratio=8)

    # 1) lane-aligned spatial (16*16 = 256), single-pass path
    x = jax.random.normal(kx, (B, C, 16, 16), jnp.float32)
    out = jax.block_until_ready(carm_forward(x, params))
    ref = carm_reference(x, params)
    assert out.shape == ref.shape
    assert jnp.max(jnp.abs(out - ref)) < 1e-4, "mismatch vs reference (aligned)"

    # 2) non-128-multiple spatial (7*7 = 49): unpadded ragged-lane reductions
    x2 = jax.random.normal(kx2, (B, C, 7, 7), jnp.float32)
    out2 = jax.block_until_ready(carm_forward(x2, params))
    ref2 = carm_reference(x2, params)
    assert jnp.max(jnp.abs(out2 - ref2)) < 1e-4, "mismatch vs reference (ragged lanes)"

    # 3) forced two-pass (large-slab) path: tiny slab budget + ragged HW tiles
    x3 = jax.random.normal(kx3, (B, C, 20, 20), jnp.float32)
    out3 = jax.block_until_ready(carm_forward(x3, params, slab_budget=20 * 1024))
    ref3 = carm_reference(x3, params)
    assert jnp.max(jnp.abs(out3 - ref3)) < 1e-4, "mismatch vs reference (two-pass)"

    # 4) bf16 HBM round-trip (f32 pooling accumulation, bf16 store)
    xb = x.astype(jnp.bfloat16)
    out4 = jax.block_until_ready(carm_forward(xb, params)).astype(jnp.float32)
    ref4 = carm_reference(xb.astype(jnp.float32), params)
    assert jnp.max(jnp.abs(out4 - ref4)) < 5e-2, "mismatch vs reference (bf16)"

    print("KERNEL_OK")
</pallas_src>

<mosaic_0001>
module attributes {stable_mosaic.version = 11 : i64} {
  func.func @_carm_fused_kernel(%arg0: i32, %arg1: memref<1x32x256xf32, #tpu.memory_space<vmem>>, %arg2: memref<2x32x4xf32, #tpu.memory_space<vmem>>, %arg3: memref<2x1x4xf32, #tpu.memory_space<vmem>>, %arg4: memref<2x4x32xf32, #tpu.memory_space<vmem>>, %arg5: memref<1x32xf32, #tpu.memory_space<vmem>>, %arg6: memref<1x32x256xf32, #tpu.memory_space<vmem>>) attributes {dimension_semantics = [#tpu.dimension_semantics<parallel>], iteration_bounds = array<i64: 2>, scalar_prefetch = 0 : i64, scratch_operands = 0 : i64, tpu.core_type = #tpu.core_type<tc>, window_params = [{transform_indices = @transform_0, window_bounds = array<i64: 1, 32, 256>}, {pipeline_mode = #tpu.pipeline_mode<synchronous>, transform_indices = @transform_1, window_bounds = array<i64: 2, 32, 4>}, {pipeline_mode = #tpu.pipeline_mode<synchronous>, transform_indices = @transform_2, window_bounds = array<i64: 2, 1, 4>}, {pipeline_mode = #tpu.pipeline_mode<synchronous>, transform_indices = @transform_3, window_bounds = array<i64: 2, 4, 32>}, {pipeline_mode = #tpu.pipeline_mode<synchronous>, transform_indices = @transform_4, window_bounds = array<i64: 1, 32>}, {transform_indices = @transform_5, window_bounds = array<i64: 1, 32, 256>}]} {
    %c0 = arith.constant 0 : index
    %c0_0 = arith.constant 0 : index
    %c0_1 = arith.constant 0 : index
    %0 = vector.load %arg1[%c0, %c0_0, %c0_1] : memref<1x32x256xf32, #tpu.memory_space<vmem>>, vector<1x32x256xf32>
    %cst = arith.constant dense<0.000000e+00> : vector<1x32xf32>
    %1 = vector.multi_reduction <add>, %0, %cst [2] : vector<1x32x256xf32> to vector<1x32xf32>
    %cst_2 = arith.constant 3.906250e-03 : f32
    %2 = vector.broadcast %cst_2 : f32 to vector<1x32xf32>
    %3 = arith.mulf %1, %2 : vector<1x32xf32>
    %cst_3 = arith.constant dense<0xFF800000> : vector<1x32xf32>
    %4 = vector.multi_reduction <maximumf>, %0, %cst_3 [2] : vector<1x32x256xf32> to vector<1x32xf32>
    %c0_4 = arith.constant 0 : index
    %c0_5 = arith.constant 0 : index
    %c0_6 = arith.constant 0 : index
    %5 = vector.load %arg2[%c0_4, %c0_5, %c0_6] : memref<2x32x4xf32, #tpu.memory_space<vmem>>, vector<1x32x4xf32>
    %6 = vector.shape_cast %5 : vector<1x32x4xf32> to vector<32x4xf32>
    %cst_7 = arith.constant dense<0.000000e+00> : vector<1x4xf32>
    %7 = tpu.matmul %3, %6, %cst_7 {dimension_numbers = #tpu.dot_dimension_numbers<[1], [0], [0], [1], [0, 0, 1, 1], [], []>} : vector<1x32xf32>, vector<32x4xf32>, vector<1x4xf32> -> vector<1x4xf32>
    %c0_8 = arith.constant 0 : index
    %c0_9 = arith.constant 0 : index
    %c0_10 = arith.constant 0 : index
    %8 = vector.load %arg3[%c0_8, %c0_9, %c0_10] : memref<2x1x4xf32, #tpu.memory_space<vmem>>, vector<1x1x4xf32>
    %9 = vector.shape_cast %8 : vector<1x1x4xf32> to vector<1x4xf32>
    %10 = arith.addf %7, %9 : vector<1x4xf32>
    %cst_11 = arith.constant 0.000000e+00 : f32
    %11 = vector.broadcast %cst_11 : f32 to vector<1x4xf32>
    %12 = arith.maximumf %10, %11 : vector<1x4xf32>
    %c1 = arith.constant 1 : index
    %c0_12 = arith.constant 0 : index
    %c0_13 = arith.constant 0 : index
    %13 = vector.load %arg2[%c1, %c0_12, %c0_13] : memref<2x32x4xf32, #tpu.memory_space<vmem>>, vector<1x32x4xf32>
    %14 = vector.shape_cast %13 : vector<1x32x4xf32> to vector<32x4xf32>
    %cst_14 = arith.constant dense<0.000000e+00> : vector<1x4xf32>
    %15 = tpu.matmul %4, %14, %cst_14 {dimension_numbers = #tpu.dot_dimension_numbers<[1], [0], [0], [1], [0, 0, 1, 1], [], []>} : vector<1x32xf32>, vector<32x4xf32>, vector<1x4xf32> -> vector<1x4xf32>
    %c1_15 = arith.constant 1 : index
    %c0_16 = arith.constant 0 : index
    %c0_17 = arith.constant 0 : index
    %16 = vector.load %arg3[%c1_15, %c0_16, %c0_17] : memref<2x1x4xf32, #tpu.memory_space<vmem>>, vector<1x1x4xf32>
    %17 = vector.shape_cast %16 : vector<1x1x4xf32> to vector<1x4xf32>
    %18 = arith.addf %15, %17 : vector<1x4xf32>
    %cst_18 = arith.constant 0.000000e+00 : f32
    %19 = vector.broadcast %cst_18 : f32 to vector<1x4xf32>
    %20 = arith.maximumf %18, %19 : vector<1x4xf32>
    %c0_19 = arith.constant 0 : index
    %c0_20 = arith.constant 0 : index
    %c0_21 = arith.constant 0 : index
    %21 = vector.load %arg4[%c0_19, %c0_20, %c0_21] : memref<2x4x32xf32, #tpu.memory_space<vmem>>, vector<1x4x32xf32>
    %22 = vector.shape_cast %21 : vector<1x4x32xf32> to vector<4x32xf32>
    %cst_22 = arith.constant dense<0.000000e+00> : vector<1x32xf32>
    %23 = tpu.matmul %12, %22, %cst_22 {dimension_numbers = #tpu.dot_dimension_numbers<[1], [0], [0], [1], [0, 0, 1, 1], [], []>} : vector<1x4xf32>, vector<4x32xf32>, vector<1x32xf32> -> vector<1x32xf32>
    %c1_23 = arith.constant 1 : index
    %c0_24 = arith.constant 0 : index
    %c0_25 = arith.constant 0 : index
    %24 = vector.load %arg4[%c1_23, %c0_24, %c0_25] : memref<2x4x32xf32, #tpu.memory_space<vmem>>, vector<1x4x32xf32>
    %25 = vector.shape_cast %24 : vector<1x4x32xf32> to vector<4x32xf32>
    %cst_26 = arith.constant dense<0.000000e+00> : vector<1x32xf32>
    %26 = tpu.matmul %20, %25, %cst_26 {dimension_numbers = #tpu.dot_dimension_numbers<[1], [0], [0], [1], [0, 0, 1, 1], [], []>} : vector<1x4xf32>, vector<4x32xf32>, vector<1x32xf32> -> vector<1x32xf32>
    %27 = arith.addf %23, %26 : vector<1x32xf32>
    %c0_27 = arith.constant 0 : index
    %c0_28 = arith.constant 0 : index
    %28 = vector.load %arg5[%c0_27, %c0_28] : memref<1x32xf32, #tpu.memory_space<vmem>>, vector<1x32xf32>
    %29 = arith.addf %27, %28 : vector<1x32xf32>
    %30 = arith.negf %29 : vector<1x32xf32>
    %31 = math.exp %30 : vector<1x32xf32>
    %cst_29 = arith.constant 1.000000e+00 : f32
    %32 = vector.broadcast %cst_29 : f32 to vector<1x32xf32>
    %33 = arith.addf %32, %31 : vector<1x32xf32>
    %34 = arith.divf %32, %33 : vector<1x32xf32>
    %35 = vector.shape_cast %34 : vector<1x32xf32> to vector<1x32x1xf32>
    %36 = vector.broadcast %35 : vector<1x32x1xf32> to vector<1x32x256xf32>
    %37 = arith.mulf %0, %36 : vector<1x32x256xf32>
    %c0_30 = arith.constant 0 : index
    %c0_31 = arith.constant 0 : index
    %c0_32 = arith.constant 0 : index
    %38 = vector.load %arg6[%c0_30, %c0_31, %c0_32] : memref<1x32x256xf32, #tpu.memory_space<vmem>>, vector<1x32x256xf32>
    tpu.vector_store %arg6[%c0_30, %c0_31, %c0_32], %37 {strides = array<i32>} : memref<1x32x256xf32, #tpu.memory_space<vmem>>, vector<1x32x256xf32>,
    return
  }
  func.func @transform_0(%arg0: i32) -> (i32, i32, i32) {
    %c0_i32 = arith.constant 0 : i32
    %c0_i32_0 = arith.constant 0 : i32
    %c0_i32_1 = arith.constant 0 : i32
    return %arg0, %c0_i32, %c0_i32_0 : i32, i32, i32
  }
  func.func @transform_1(%arg0: i32) -> (i32, i32, i32) {
    %c0_i32 = arith.constant 0 : i32
    %c0_i32_0 = arith.constant 0 : i32
    %c0_i32_1 = arith.constant 0 : i32
    %c0_i32_2 = arith.constant 0 : i32
    return %c0_i32, %c0_i32_0, %c0_i32_1 : i32, i32, i32
  }
  func.func @transform_2(%arg0: i32) -> (i32, i32, i32) {
    %c0_i32 = arith.constant 0 : i32
    %c0_i32_0 = arith.constant 0 : i32
    %c0_i32_1 = arith.constant 0 : i32
    %c0_i32_2 = arith.constant 0 : i32
    return %c0_i32, %c0_i32_0, %c0_i32_1 : i32, i32, i32
  }
  func.func @transform_3(%arg0: i32) -> (i32, i32, i32) {
    %c0_i32 = arith.constant 0 : i32
    %c0_i32_0 = arith.constant 0 : i32
    %c0_i32_1 = arith.constant 0 : i32
    %c0_i32_2 = arith.constant 0 : i32
    return %c0_i32, %c0_i32_0, %c0_i32_1 : i32, i32, i32
  }
  func.func @transform_4(%arg0: i32) -> (i32, i32) {
    %c0_i32 = arith.constant 0 : i32
    %c0_i32_0 = arith.constant 0 : i32
    %c0_i32_1 = arith.constant 0 : i32
    return %c0_i32, %c0_i32_0 : i32, i32
  }
  func.func @transform_5(%arg0: i32) -> (i32, i32, i32) {
    %c0_i32 = arith.constant 0 : i32
    %c0_i32_0 = arith.constant 0 : i32
    %c0_i32_1 = arith.constant 0 : i32
    return %arg0, %c0_i32, %c0_i32_0 : i32, i32, i32
  }
}

</mosaic_0001>

<llo_original>
// kernel: tpu_custom_call.1
$region0: #{tpu_custom_call.1}
  #allocation0 [shape = 'u32[]', space=smem, size = 0x4, offset = 0x4, fixed_abs, tag = 'smem constant byte address 0x4 - core index']
  #allocation1 [shape = 'u32[144,128]{1,0:T(1,128)}', space=vmem, size = 0x12000, scoped, tag = 'internal scratch']
  %s0 = inlined_call_operand.hbm [shape: f32[2,32,256], index: 0, kind: input, shape index: {}]
  %s1 = inlined_call_operand.vmem [shape: f32[2,32,4], index: 1, kind: input, shape index: {}]
  %s2 = inlined_call_operand.vmem [shape: f32[2,1,4], index: 2, kind: input, shape index: {}]
  %s3 = inlined_call_operand.vmem [shape: f32[2,4,32], index: 3, kind: input, shape index: {}]
  %s4 = inlined_call_operand.vmem [shape: f32[1,32], index: 4, kind: input, shape index: {}]
  %s5 = inlined_call_operand.hbm [shape: f32[2,32,256], index: 5, kind: output, shape index: {}]
  %s6 = sld [smem:[#allocation0]]
  $region57: #{tpu_custom_call.1} parent=0
    _
  %s8 = ssub.s32 1, %s6
  %s9 = scalar_select 0, %s8, %s6
  $region1: #{tpu_custom_call.1} parent=0
    #allocation2 [shape = 'u8[65536]{0}', space=vmem, size = 0x10000, scoped, tag = 'input window, operand 0']
    #allocation3 [shape = 's32[2]{0}', space=sflag, size = 0x8, scoped, tag = 'scoped memory for tpu_custom_call.1']
    #allocation4 [shape = 's32[2]{0}', space=sflag, size = 0x8, scoped, tag = 'scoped memory for tpu_custom_call.1']
    #allocation5 [shape = 'u8[65536]{0}', space=vmem, size = 0x10000, scoped, tag = 'output window, operand 0']
    %10 = vsyncpa [#allocation3], 0
    %s11 = scalar_lea.sflag [#allocation3], 1
    %12 = vsyncpa %s11, 0
    %13 = vsyncpa [#allocation4], 0
    %s14 = scalar_lea.sflag [#allocation4], 1
    %15 = vsyncpa %s14, 0
    loop: start=0, step=1, limit=4
    $region2: #{tpu_custom_call.1} parent=1 // loop_pre_header
      _
    $region3: #{tpu_custom_call.1} parent=1 // loop_header
      %s17 = sphi 0, %s21
      %p18 = scmp.ge.s32.totalorder %s17, 4
      %s27 = sphi 0, %s29
      %s30 = sphi 0, %s27
      %s31 = sphi 0, %s30
      %s47 = sphi 0, %s31
      %s51 = sphi 0, %s51
      %s53 = sphi 0, %s51
      %s54 = sphi 0, %s53
      %s68 = sphi 0, %s54
      %s72 = sphi 0, %s72
      %s74 = sphi 0, %s72
      %s75 = sphi 0, %s74
      %s89 = sphi 0, %s75
      %s93 = sphi 0, %s93
      %s95 = sphi 0, %s93
      %s96 = sphi 0, %s95
      %s110 = sphi 0, %s96
      %s114 = sphi 0, %s114
      %s116 = sphi 0, %s114
      %s117 = sphi 0, %s116
      %s131 = sphi 0, %s117
      %s137 = sphi 0, %s139
      %s140 = sphi 0, %s137
      %s141 = sphi 0, %s140
      %s157 = sphi 0, %s141
    $region4: #{tpu_custom_call.1} parent=1 // loop_header_branch
      %20 = sbr.rel (%p18) target = $region8
    $region5: #{tpu_custom_call.1} parent=1 // loop_body
      %s22 = ssub.s32 %s17, 1
      %s23 = ssub.s32 %s17, 2
      %s24 = sadd.s32 %s17, 1
      %s25 = ssub.s32 %s17, %s24
      %p26 = scmp.eq.s32.totalorder %s25, 0
      %s28 = sadd.s32 %s27, 1
      %s29 = scalar_select %p26, %s27, %s28
      %p32 = pneg %p26
      %p33 = scmp.eq.s32.totalorder %s17, 1
      %p34 = por %p32, %p33
      %p35 = scmp.ne.s32.totalorder %s27, %s30
      %p36 = scmp.eq.s32.totalorder %s17, 0
      %p37 = por %p35, %p36
      %p38 = scmp.ne.s32.totalorder %s27, %s30
      %p39 = scmp.eq.s32.totalorder %s22, 1
      %p40 = por %p38, %p39
      %p41 = scmp.ne.s32.totalorder %s30, %s31
      %p42 = scmp.eq.s32.totalorder %s22, 0
      %p43 = por %p41, %p42
      %p44 = scmp.ne.s32.totalorder %s30, %s31
      %p45 = scmp.eq.s32.totalorder %s23, 1
      %p46 = por %p44, %p45
      %p48 = scmp.ne.s32.totalorder %s31, %s47
      %p49 = scmp.eq.s32.totalorder %s23, 0
      %p50 = por %p48, %p49
      %s52 = sadd.s32 %s51, 1
      %p55 = scmp.eq.s32.totalorder %s17, 1
      %p56 = scmp.ne.s32.totalorder %s51, %s53
      %p57 = scmp.eq.s32.totalorder %s17, 0
      %p58 = por %p56, %p57
      %p59 = scmp.ne.s32.totalorder %s51, %s53
      %p60 = scmp.eq.s32.totalorder %s22, 1
      %p61 = por %p59, %p60
      %p62 = scmp.ne.s32.totalorder %s53, %s54
      %p63 = scmp.eq.s32.totalorder %s22, 0
      %p64 = por %p62, %p63
      %p65 = scmp.ne.s32.totalorder %s53, %s54
      %p66 = scmp.eq.s32.totalorder %s23, 1
      %p67 = por %p65, %p66
      %p69 = scmp.ne.s32.totalorder %s54, %s68
      %p70 = scmp.eq.s32.totalorder %s23, 0
      %p71 = por %p69, %p70
      %s73 = sadd.s32 %s72, 1
      %p76 = scmp.eq.s32.totalorder %s17, 1
      %p77 = scmp.ne.s32.totalorder %s72, %s74
      %p78 = scmp.eq.s32.totalorder %s17, 0
      %p79 = por %p77, %p78
      %p80 = scmp.ne.s32.totalorder %s72, %s74
      %p81 = scmp.eq.s32.totalorder %s22, 1
      %p82 = por %p80, %p81
      %p83 = scmp.ne.s32.totalorder %s74, %s75
      %p84 = scmp.eq.s32.totalorder %s22, 0
      %p85 = por %p83, %p84
      %p86 = scmp.ne.s32.totalorder %s74, %s75
      %p87 = scmp.eq.s32.totalorder %s23, 1
      %p88 = por %p86, %p87
      %p90 = scmp.ne.s32.totalorder %s75, %s89
      %p91 = scmp.eq.s32.totalorder %s23, 0
      %p92 = por %p90, %p91
      %s94 = sadd.s32 %s93, 1
      %p97 = scmp.eq.s32.totalorder %s17, 1
      %p98 = scmp.ne.s32.totalorder %s93, %s95
      %p99 = scmp.eq.s32.totalorder %s17, 0
      %p100 = por %p98, %p99
      %p101 = scmp.ne.s32.totalorder %s93, %s95
      %p102 = scmp.eq.s32.totalorder %s22, 1
      %p103 = por %p101, %p102
      %p104 = scmp.ne.s32.totalorder %s95, %s96
      %p105 = scmp.eq.s32.totalorder %s22, 0
      %p106 = por %p104, %p105
      %p107 = scmp.ne.s32.totalorder %s95, %s96
      %p108 = scmp.eq.s32.totalorder %s23, 1
      %p109 = por %p107, %p108
      %p111 = scmp.ne.s32.totalorder %s96, %s110
      %p112 = scmp.eq.s32.totalorder %s23, 0
      %p113 = por %p111, %p112
      %s115 = sadd.s32 %s114, 1
      %p118 = scmp.eq.s32.totalorder %s17, 1
      %p119 = scmp.ne.s32.totalorder %s114, %s116
      %p120 = scmp.eq.s32.totalorder %s17, 0
      %p121 = por %p119, %p120
      %p122 = scmp.ne.s32.totalorder %s114, %s116
      %p123 = scmp.eq.s32.totalorder %s22, 1
      %p124 = por %p122, %p123
      %p125 = scmp.ne.s32.totalorder %s116, %s117
      %p126 = scmp.eq.s32.totalorder %s22, 0
      %p127 = por %p125, %p126
      %p128 = scmp.ne.s32.totalorder %s116, %s117
      %p129 = scmp.eq.s32.totalorder %s23, 1
      %p130 = por %p128, %p129
      %p132 = scmp.ne.s32.totalorder %s117, %s131
      %p133 = scmp.eq.s32.totalorder %s23, 0
      %p134 = por %p132, %p133
      %s135 = ssub.s32 %s17, %s24
      %p136 = scmp.eq.s32.totalorder %s135, 0
      %s138 = sadd.s32 %s137, 1
      %s139 = scalar_select %p136, %s137, %s138
      %p142 = pneg %p136
      %p143 = scmp.eq.s32.totalorder %s17, 1
      %p144 = por %p142, %p143
      %p145 = scmp.ne.s32.totalorder %s137, %s140
      %p146 = scmp.eq.s32.totalorder %s17, 0
      %p147 = por %p145, %p146
      %p148 = scmp.ne.s32.totalorder %s137, %s140
      %p149 = scmp.eq.s32.totalorder %s22, 1
      %p150 = por %p148, %p149
      %p151 = scmp.ne.s32.totalorder %s140, %s141
      %p152 = scmp.eq.s32.totalorder %s22, 0
      %p153 = por %p151, %p152
      %p154 = scmp.ne.s32.totalorder %s140, %s141
      %p155 = scmp.eq.s32.totalorder %s23, 1
      %p156 = por %p154, %p155
      %p158 = scmp.ne.s32.totalorder %s141, %s157
      %p159 = scmp.eq.s32.totalorder %s23, 0
      %p160 = por %p158, %p159
      %p161 = scmp.le.s32.totalorder 1, %s17
      %p162 = scmp.lt.s32.totalorder %s17, 3
      %p163 = pnand %p161, %p162
      %p164 = pneg %p163
      // Predicated region
      $region9: #{tpu_custom_call.1} parent=5 // pred_check
        _
      $region10: #{tpu_custom_call.1} parent=5 // pred_check_branch
        %166 = sbr.rel (%p163) target = $region12
      $region11: #{tpu_custom_call.1} parent=5 // pred_region
        %s167 = ssub.s32 %s17, 1
        // Predicated region
        $region13: #{tpu_custom_call.1} parent=11 // pred_check
          %p168 = pneg %p64
        $region14: #{tpu_custom_call.1} parent=11 // pred_check_branch
          %170 = sbr.rel (%p168) target = $region16
        $region15: #{tpu_custom_call.1} parent=11 // pred_region
          _
        $region16: #{tpu_custom_call.1} parent=11 // pred_fallthru
          _
        // Predicated region
        $region17: #{tpu_custom_call.1} parent=11 // pred_check
          %p171 = pneg %p85
        $region18: #{tpu_custom_call.1} parent=11 // pred_check_branch
          %173 = sbr.rel (%p171) target = $region20
        $region19: #{tpu_custom_call.1} parent=11 // pred_region
          _
        $region20: #{tpu_custom_call.1} parent=11 // pred_fallthru
          _
        // Predicated region
        $region21: #{tpu_custom_call.1} parent=11 // pred_check
          %p174 = pneg %p106
        $region22: #{tpu_custom_call.1} parent=11 // pred_check_branch
          %176 = sbr.rel (%p174) target = $region24
        $region23: #{tpu_custom_call.1} parent=11 // pred_region
          _
        $region24: #{tpu_custom_call.1} parent=11 // pred_fallthru
          _
        // Predicated region
        $region25: #{tpu_custom_call.1} parent=11 // pred_check
          %p177 = pneg %p127
        $region26: #{tpu_custom_call.1} parent=11 // pred_check_branch
          %179 = sbr.rel (%p177) target = $region28
        $region27: #{tpu_custom_call.1} parent=11 // pred_region
          _
        $region28: #{tpu_custom_call.1} parent=11 // pred_fallthru
          _
      $region12: #{tpu_custom_call.1} parent=5 // pred_fallthru
        _
      %p180 = scmp.lt.s32.totalorder %s17, 2
      // Predicated region
      $region29: #{tpu_custom_call.1} parent=5 // pred_check
        %p181 = pneg %p180
      $region30: #{tpu_custom_call.1} parent=5 // pred_check_branch
        %183 = sbr.rel (%p181) target = $region32
      $region31: #{tpu_custom_call.1} parent=5 // pred_region
        // Predicated region
        $region33: #{tpu_custom_call.1} parent=31 // pred_check
          %p184 = pneg %p37
        $region34: #{tpu_custom_call.1} parent=31 // pred_check_branch
          %186 = sbr.rel (%p184) target = $region36
        $region35: #{tpu_custom_call.1} parent=31 // pred_region
          %s187 = sand.u32 %s27, 1
          %s188 = scalar_lea.sflag [#allocation3], %s187
          %s189 = sand.u32 %s27, 1
          %s190 = smul.addr %s189, 64
          %s191 = scalar_lea.vmem [#allocation2], %s190
          %s193 = ssub.s32 1024, 1024
          %194 = vsyncadd %s188, %s193
          %s195 = smul.addr %s17, 8
          %s196 = smul.addr %s195, 128
          %s197 = scalar_lea.hbm %s0, %s196
          %s198 = sshll.u32 %s191, 4
          %s199 = int_to_ptr.vmem [resolvable:$true] %s198
          %204 = dma.hbm_to_vmem [thread:$0]  %s197, 1024, %s199, %s188, 256, 256, 16
        $region36: #{tpu_custom_call.1} parent=31 // pred_fallthru
          _
      $region32: #{tpu_custom_call.1} parent=5 // pred_fallthru
        _
      %p205 = scmp.le.s32.totalorder 1, %s17
      %p206 = scmp.lt.s32.totalorder %s17, 3
      %p207 = pnand %p205, %p206
      %p208 = pneg %p207
      // Predicated region
      $region37: #{tpu_custom_call.1} parent=5 // pred_check
        _
      $region38: #{tpu_custom_call.1} parent=5 // pred_check_branch
        %210 = sbr.rel (%p207) target = $region40
      $region39: #{tpu_custom_call.1} parent=5 // pred_region
        %s211 = ssub.s32 %s17, 1
        %s212 = sand.u32 %s30, 1
        %s213 = scalar_lea.sflag [#allocation3], %s212
        %s214 = sand.u32 %s30, 1
        %s215 = smul.addr %s214, 64
        %s216 = scalar_lea.vmem [#allocation2], %s215
        // Predicated region
        $region41: #{tpu_custom_call.1} parent=39 // pred_check
          %p217 = pneg %p43
        $region42: #{tpu_custom_call.1} parent=39 // pred_check_branch
          %219 = sbr.rel (%p217) target = $region44
        $region43: #{tpu_custom_call.1} parent=39 // pred_region
          %220 = dma.done %s213, 1024
        $region44: #{tpu_custom_call.1} parent=39 // pred_fallthru
          _
        %s221 = sand.u32 %s30, 1
        %s222 = scalar_lea.sflag [#allocation3], %s221
        %s223 = sand.u32 %s30, 1
        %s224 = smul.addr %s223, 64
        %s225 = scalar_lea.vmem [#allocation2], %s224
        %p226 = pneg %p43
        %p227 = pneg %p40
        %p228 = pneg %p64
        %p229 = pneg %p61
        %p230 = pneg %p85
        %p231 = pneg %p82
        %p232 = pneg %p106
        %p233 = pneg %p103
        %p234 = pneg %p127
        %p235 = pneg %p124
        %p236 = pneg %p153
        %p237 = pneg %p150
        %s238 = sand.u32 %s140, 1
        %s239 = scalar_lea.sflag [#allocation4], %s238
        %s240 = sand.u32 %s140, 1
        %s241 = smul.addr %s240, 64
        %s242 = scalar_lea.vmem [#allocation5], %s241
        %v243 = vld [vmem:[%s216] sm:$0xff]
        %v244 = vld [vmem:[%s216 + $0x8] sm:$0xff]
        %v245 = vld [vmem:[%s216 + $0x10] sm:$0xff]
        %v246 = vld [vmem:[%s216 + $0x18] sm:$0xff]
        %v247 = vld [vmem:[%s216 + $0x20] sm:$0xff]
        %v248 = vld [vmem:[%s216 + $0x28] sm:$0xff]
        %v249 = vld [vmem:[%s216 + $0x30] sm:$0xff]
        %v250 = vld [vmem:[%s216 + $0x38] sm:$0xff]
        %v251 = vadd.f32 %v243, %v244
        %252 = vadd.xlane.f32.xlu0 %v251
        %v253 = vpop.xlane.xlu0 %252
        %v254 = vadd.f32 %v245, %v246
        %255 = vadd.xlane.f32.xlu0 %v254
        %v256 = vpop.xlane.xlu0 %255
        %v257 = vadd.f32 %v247, %v248
        %258 = vadd.xlane.f32.xlu0 %v257
        %v259 = vpop.xlane.xlu0 %258
        %v260 = vadd.f32 %v249, %v250
        %261 = vadd.xlane.f32.xlu0 %v260
        %v262 = vpop.xlane.xlu0 %261
        %v263 = vmul.f32 %v253, 0.00390625
        %v264 = vmul.f32 %v256, 0.00390625
        %v265 = vmul.f32 %v259, 0.00390625
        %v266 = vmul.f32 %v262, 0.00390625
        %v267 = vmax.f32 %v243, %v244
        %268 = vmax.xlane.f32.xlu0 %v267
        %v269 = vpop.xlane.xlu0 %268
        %v270 = vmax.f32 %v245, %v246
        %271 = vmax.xlane.f32.xlu0 %v270
        %v272 = vpop.xlane.xlu0 %271
        %v273 = vmax.f32 %v247, %v248
        %274 = vmax.xlane.f32.xlu0 %v273
        %v275 = vpop.xlane.xlu0 %274
        %v276 = vmax.f32 %v249, %v250
        %277 = vmax.xlane.f32.xlu0 %v276
        %v278 = vpop.xlane.xlu0 %277
        %v279 = vld [vmem:[%s1] sm:$0xff]
        %v280 = vld [vmem:[%s1 + $0x8] sm:$0xff]
        %v281 = vld [vmem:[%s1 + $0x10] sm:$0xff]
        %v282 = vld [vmem:[%s1 + $0x18] sm:$0xff]
        %v283 = vld [vmem:[%s2] sm:$0x1]
        %v288 = vlaneseq
        %v289 = vand.u32 %v288, 127
        %v290 = vlaneseq
        %v291 = vshrl.u32 %v290, 7
        %v292 = vsub.s32 %v289, %v291
        %v293 = vrot.slane %v263, %v292
        %v294 = vadd.s32 %v289, 4294967288
        %v295 = vlaneseq
        %v296 = vshrl.u32 %v295, 7
        %v297 = vsub.s32 %v294, %v296
        %v298 = vrot.slane %v264, %v297
        %vm299 = vcmask 130112
        %v300 = vsel %vm299, %v298, %v293
        %v301 = vadd.s32 %v289, 4294967280
        %v302 = vlaneseq
        %v303 = vshrl.u32 %v302, 7
        %v304 = vsub.s32 %v301, %v303
        %v305 = vrot.slane %v265, %v304
        %vm306 = vcmask 195712
        %v307 = vsel %vm306, %v305, %v300
        %v308 = vadd.s32 %v289, 4294967272
        %v309 = vlaneseq
        %v310 = vshrl.u32 %v309, 7
        %v311 = vsub.s32 %v308, %v310
        %v312 = vrot.slane %v266, %v311
        %vm313 = vcmask 261312
        %v314 = vsel %vm313, %v312, %v307
        %vm315 = vcmask 261120
        %v316 = vsel %vm315, %v314, 0
        %318 = vmatprep.subr.mxu0 0.0
        %319 = vmatpush1.msra.mxu0 %v279
        %320 = vmatprep.subr.mxu0 0.0
        %321 = vmatpush1.msra.mxu0 %v280
        %322 = vmatprep.subr.mxu0 0.0
        %323 = vmatpush1.msra.mxu0 %v281
        %324 = vmatprep.subr.mxu0 0.0
        %325 = vmatpush1.msra.mxu0 %v282
        %326 = vmatprep.subr.mxu0 0.0
        %327 = vmatpush1.msra.mxu0 0.0
        %328 = vmatprep.subr.mxu0 0.0
        %329 = vmatpush1.msra.mxu0 0.0
        %330 = vmatprep.subr.mxu0 0.0
        %331 = vmatpush1.msra.mxu0 0.0
        %332 = vmatprep.subr.mxu0 0.0
        %333 = vmatpush1.msra.mxu0 0.0
        %334 = vmatprep.subr.mxu0 0.0
        %335 = vmatpush1.msra.mxu0 0.0
        %336 = vmatprep.subr.mxu0 0.0
        %337 = vmatpush1.msra.mxu0 0.0
        %338 = vmatprep.subr.mxu0 0.0
        %339 = vmatpush1.msra.mxu0 0.0
        %340 = vmatprep.subr.mxu0 0.0
        %341 = vmatpush1.msra.mxu0 0.0
        %342 = vmatprep.subr.mxu0 0.0
        %343 = vmatpush1.msra.mxu0 0.0
        %344 = vmatprep.subr.mxu0 0.0
        %345 = vmatpush1.msra.mxu0 0.0
        %346 = vmatprep.subr.mxu0 0.0
        %347 = vmatpush1.msra.mxu0 0.0
        %348 = vmatprep.subr.mxu0 0.0
        %349 = vmatpush1.msra.mxu0 0.0
        %350 = vmatprep.subr.mxu0 0.0
        %351 = vmatpush1.msra.mxu0 0.0
        %352 = vmatprep.subr.mxu0 0.0
        %353 = vmatpush1.msra.mxu0 0.0
        %354 = vmatprep.subr.mxu0 0.0
        %355 = vmatpush1.msra.mxu0 0.0
        %356 = vmatprep.subr.mxu0 0.0
        %357 = vmatpush1.msra.mxu0 0.0
        %358 = vmatprep.subr.mxu0 0.0
        %359 = vmatpush1.msra.mxu0 0.0
        %360 = vmatprep.subr.mxu0 0.0
        %361 = vmatpush1.msra.mxu0 0.0
        %362 = vmatprep.subr.mxu0 0.0
        %363 = vmatpush1.msra.mxu0 0.0
        %364 = vmatprep.subr.mxu0 0.0
        %365 = vmatpush1.msra.mxu0 0.0
        %366 = vmatprep.subr.mxu0 0.0
        %367 = vmatpush1.msra.mxu0 0.0
        %368 = vmatprep.subr.mxu0 0.0
        %369 = vmatpush1.msra.mxu0 0.0
        %370 = vmatprep.subr.mxu0 0.0
        %371 = vmatpush1.msra.mxu0 0.0
        %372 = vmatprep.subr.mxu0 0.0
        %373 = vmatpush1.msra.mxu0 0.0
        %374 = vmatprep.subr.mxu0 0.0
        %375 = vmatpush1.msra.mxu0 0.0
        %376 = vmatprep.subr.mxu0 0.0
        %377 = vmatpush1.msra.mxu0 0.0
        %378 = vmatprep.subr.mxu0 0.0
        %379 = vmatpush1.msra.mxu0 0.0
        %380 = vmatprep.subr.mxu0 0.0
        %381 = vmatpush1.msra.mxu0 0.0
        %382 = vmatprep.mubr.f32.mxu0 0.0
        %383 = vmatmul.mubr.f32.gmra.mrb[0].mxu0 %v316
        %v384 = vpop.f32.mrb[0].mxu0
        %v385 = vadd.f32 %v283, %v384
        %v386 = vpop.f32.mrb[0].mxu0
        %387 = vdwg.mxu0
        %v388 = vmax.f32 %v385, 0.0
        %s389 = scalar_lea.vmem %s1, 32
        %v390 = vld [vmem:[%s389] sm:$0xff]
        %v391 = vld [vmem:[%s389 + $0x8] sm:$0xff]
        %v392 = vld [vmem:[%s389 + $0x10] sm:$0xff]
        %v393 = vld [vmem:[%s389 + $0x18] sm:$0xff]
        %s394 = scalar_lea.vmem %s2, 1
        %v395 = vld [vmem:[%s394] sm:$0x1]
        %v400 = vlaneseq
        %v401 = vshrl.u32 %v400, 7
        %v402 = vsub.s32 %v289, %v401
        %v403 = vrot.slane %v269, %v402
        %v404 = vlaneseq
        %v405 = vshrl.u32 %v404, 7
        %v406 = vsub.s32 %v294, %v405
        %v407 = vrot.slane %v272, %v406
        %v408 = vsel %vm299, %v407, %v403
        %v409 = vlaneseq
        %v410 = vshrl.u32 %v409, 7
        %v411 = vsub.s32 %v301, %v410
        %v412 = vrot.slane %v275, %v411
        %v413 = vsel %vm306, %v412, %v408
        %v414 = vlaneseq
        %v415 = vshrl.u32 %v414, 7
        %v416 = vsub.s32 %v308, %v415
        %v417 = vrot.slane %v278, %v416
        %v418 = vsel %vm313, %v417, %v413
        %v419 = vsel %vm315, %v418, 0
        %421 = vmatprep.subr.mxu0 0.0
        %422 = vmatpush1.msra.mxu0 %v390
        %423 = vmatprep.subr.mxu0 0.0
        %424 = vmatpush1.msra.mxu0 %v391
        %425 = vmatprep.subr.mxu0 0.0
        %426 = vmatpush1.msra.mxu0 %v392
        %427 = vmatprep.subr.mxu0 0.0
        %428 = vmatpush1.msra.mxu0 %v393
        %429 = vmatprep.subr.mxu0 0.0
        %430 = vmatpush1.msra.mxu0 0.0
        %431 = vmatprep.subr.mxu0 0.0
        %432 = vmatpush1.msra.mxu0 0.0
        %433 = vmatprep.subr.mxu0 0.0
        %434 = vmatpush1.msra.mxu0 0.0
        %435 = vmatprep.subr.mxu0 0.0
        %436 = vmatpush1.msra.mxu0 0.0
        %437 = vmatprep.subr.mxu0 0.0
        %438 = vmatpush1.msra.mxu0 0.0
        %439 = vmatprep.subr.mxu0 0.0
        %440 = vmatpush1.msra.mxu0 0.0
        %441 = vmatprep.subr.mxu0 0.0
        %442 = vmatpush1.msra.mxu0 0.0
        %443 = vmatprep.subr.mxu0 0.0
        %444 = vmatpush1.msra.mxu0 0.0
        %445 = vmatprep.subr.mxu0 0.0
        %446 = vmatpush1.msra.mxu0 0.0
        %447 = vmatprep.subr.mxu0 0.0
        %448 = vmatpush1.msra.mxu0 0.0
        %449 = vmatprep.subr.mxu0 0.0
        %450 = vmatpush1.msra.mxu0 0.0
        %451 = vmatprep.subr.mxu0 0.0
        %452 = vmatpush1.msra.mxu0 0.0
        %453 = vmatprep.subr.mxu0 0.0
        %454 = vmatpush1.msra.mxu0 0.0
        %455 = vmatprep.subr.mxu0 0.0
        %456 = vmatpush1.msra.mxu0 0.0
        %457 = vmatprep.subr.mxu0 0.0
        %458 = vmatpush1.msra.mxu0 0.0
        %459 = vmatprep.subr.mxu0 0.0
        %460 = vmatpush1.msra.mxu0 0.0
        %461 = vmatprep.subr.mxu0 0.0
        %462 = vmatpush1.msra.mxu0 0.0
        %463 = vmatprep.subr.mxu0 0.0
        %464 = vmatpush1.msra.mxu0 0.0
        %465 = vmatprep.subr.mxu0 0.0
        %466 = vmatpush1.msra.mxu0 0.0
        %467 = vmatprep.subr.mxu0 0.0
        %468 = vmatpush1.msra.mxu0 0.0
        %469 = vmatprep.subr.mxu0 0.0
        %470 = vmatpush1.msra.mxu0 0.0
        %471 = vmatprep.subr.mxu0 0.0
        %472 = vmatpush1.msra.mxu0 0.0
        %473 = vmatprep.subr.mxu0 0.0
        %474 = vmatpush1.msra.mxu0 0.0
        %475 = vmatprep.subr.mxu0 0.0
        %476 = vmatpush1.msra.mxu0 0.0
        %477 = vmatprep.subr.mxu0 0.0
        %478 = vmatpush1.msra.mxu0 0.0
        %479 = vmatprep.subr.mxu0 0.0
        %480 = vmatpush1.msra.mxu0 0.0
        %481 = vmatprep.subr.mxu0 0.0
        %482 = vmatpush1.msra.mxu0 0.0
        %483 = vmatprep.subr.mxu0 0.0
        %484 = vmatpush1.msra.mxu0 0.0
        %485 = vmatprep.mubr.f32.mxu0 0.0
        %486 = vmatmul.mubr.f32.gmra.mrb[0].mxu0 %v419
        %v487 = vpop.f32.mrb[0].mxu0
        %v488 = vadd.f32 %v395, %v487
        %v489 = vpop.f32.mrb[0].mxu0
        %490 = vdwg.mxu0
        %v491 = vmax.f32 %v488, 0.0
        %v492 = vld [vmem:[%s3] sm:$0xf]
        %s493 = scalar_lea.vmem %s3, 4
        %v494 = vld [vmem:[%s493] sm:$0xf]
        %vm495 = vcmask 31744
        %v497 = vsel %vm495, %v491, 0
        %vm499 = vcmask 1043456
        %v501 = vsel %vm499, %v494, 0
        %503 = vmatprep.subr.mxu0 0.0
        %504 = vmatpush1.msra.mxu0 %v501
        %505 = vmatprep.subr.mxu0 0.0
        %506 = vmatpush1.msra.mxu0 0.0
        %507 = vmatprep.subr.mxu0 0.0
        %508 = vmatpush1.msra.mxu0 0.0
        %509 = vmatprep.subr.mxu0 0.0
        %510 = vmatpush1.msra.mxu0 0.0
        %511 = vmatprep.subr.mxu0 0.0
        %512 = vmatpush1.msra.mxu0 0.0
        %513 = vmatprep.subr.mxu0 0.0
        %514 = vmatpush1.msra.mxu0 0.0
        %515 = vmatprep.subr.mxu0 0.0
        %516 = vmatpush1.msra.mxu0 0.0
        %517 = vmatprep.subr.mxu0 0.0
        %518 = vmatpush1.msra.mxu0 0.0
        %519 = vmatprep.subr.mxu0 0.0
        %520 = vmatpush1.msra.mxu0 0.0
        %521 = vmatprep.subr.mxu0 0.0
        %522 = vmatpush1.msra.mxu0 0.0
        %523 = vmatprep.subr.mxu0 0.0
        %524 = vmatpush1.msra.mxu0 0.0
        %525 = vmatprep.subr.mxu0 0.0
        %526 = vmatpush1.msra.mxu0 0.0
        %527 = vmatprep.subr.mxu0 0.0
        %528 = vmatpush1.msra.mxu0 0.0
        %529 = vmatprep.subr.mxu0 0.0
        %530 = vmatpush1.msra.mxu0 0.0
        %531 = vmatprep.subr.mxu0 0.0
        %532 = vmatpush1.msra.mxu0 0.0
        %533 = vmatprep.subr.mxu0 0.0
        %534 = vmatpush1.msra.mxu0 0.0
        %535 = vmatprep.subr.mxu0 0.0
        %536 = vmatpush1.msra.mxu0 0.0
        %537 = vmatprep.subr.mxu0 0.0
        %538 = vmatpush1.msra.mxu0 0.0
        %539 = vmatprep.subr.mxu0 0.0
        %540 = vmatpush1.msra.mxu0 0.0
        %541 = vmatprep.subr.mxu0 0.0
        %542 = vmatpush1.msra.mxu0 0.0
        %543 = vmatprep.subr.mxu0 0.0
        %544 = vmatpush1.msra.mxu0 0.0
        %545 = vmatprep.subr.mxu0 0.0
        %546 = vmatpush1.msra.mxu0 0.0
        %547 = vmatprep.subr.mxu0 0.0
        %548 = vmatpush1.msra.mxu0 0.0
        %549 = vmatprep.subr.mxu0 0.0
        %550 = vmatpush1.msra.mxu0 0.0
        %551 = vmatprep.subr.mxu0 0.0
        %552 = vmatpush1.msra.mxu0 0.0
        %553 = vmatprep.subr.mxu0 0.0
        %554 = vmatpush1.msra.mxu0 0.0
        %555 = vmatprep.subr.mxu0 0.0
        %556 = vmatpush1.msra.mxu0 0.0
        %557 = vmatprep.subr.mxu0 0.0
        %558 = vmatpush1.msra.mxu0 0.0
        %559 = vmatprep.subr.mxu0 0.0
        %560 = vmatpush1.msra.mxu0 0.0
        %561 = vmatprep.subr.mxu0 0.0
        %562 = vmatpush1.msra.mxu0 0.0
        %563 = vmatprep.subr.mxu0 0.0
        %564 = vmatpush1.msra.mxu0 0.0
        %565 = vmatprep.subr.mxu0 0.0
        %566 = vmatpush1.msra.mxu0 0.0
        %567 = vmatprep.mubr.f32.mxu0 0.0
        %568 = vmatmul.mubr.f32.gmra.mrb[0].mxu0 %v497
        %v569 = vpop.f32.mrb[0].mxu0
        %v570 = vadd.f32 0.0, %v569
        %v571 = vpop.f32.mrb[0].mxu0
        %572 = vdwg.mxu0
        %v574 = vsel %vm495, %v388, 0
        %v577 = vsel %vm499, %v492, 0
        %579 = vmatprep.subr.mxu0 0.0
        %580 = vmatpush1.msra.mxu0 %v577
        %581 = vmatprep.subr.mxu0 0.0
        %582 = vmatpush1.msra.mxu0 0.0
        %583 = vmatprep.subr.mxu0 0.0
        %584 = vmatpush1.msra.mxu0 0.0
        %585 = vmatprep.subr.mxu0 0.0
        %586 = vmatpush1.msra.mxu0 0.0
        %587 = vmatprep.subr.mxu0 0.0
        %588 = vmatpush1.msra.mxu0 0.0
        %589 = vmatprep.subr.mxu0 0.0
        %590 = vmatpush1.msra.mxu0 0.0
        %591 = vmatprep.subr.mxu0 0.0
        %592 = vmatpush1.msra.mxu0 0.0
        %593 = vmatprep.subr.mxu0 0.0
        %594 = vmatpush1.msra.mxu0 0.0
        %595 = vmatprep.subr.mxu0 0.0
        %596 = vmatpush1.msra.mxu0 0.0
        %597 = vmatprep.subr.mxu0 0.0
        %598 = vmatpush1.msra.mxu0 0.0
        %599 = vmatprep.subr.mxu0 0.0
        %600 = vmatpush1.msra.mxu0 0.0
        %601 = vmatprep.subr.mxu0 0.0
        %602 = vmatpush1.msra.mxu0 0.0
        %603 = vmatprep.subr.mxu0 0.0
        %604 = vmatpush1.msra.mxu0 0.0
        %605 = vmatprep.subr.mxu0 0.0
        %606 = vmatpush1.msra.mxu0 0.0
        %607 = vmatprep.subr.mxu0 0.0
        %608 = vmatpush1.msra.mxu0 0.0
        %609 = vmatprep.subr.mxu0 0.0
        %610 = vmatpush1.msra.mxu0 0.0
        %611 = vmatprep.subr.mxu0 0.0
        %612 = vmatpush1.msra.mxu0 0.0
        %613 = vmatprep.subr.mxu0 0.0
        %614 = vmatpush1.msra.mxu0 0.0
        %615 = vmatprep.subr.mxu0 0.0
        %616 = vmatpush1.msra.mxu0 0.0
        %617 = vmatprep.subr.mxu0 0.0
        %618 = vmatpush1.msra.mxu0 0.0
        %619 = vmatprep.subr.mxu0 0.0
        %620 = vmatpush1.msra.mxu0 0.0
        %621 = vmatprep.subr.mxu0 0.0
        %622 = vmatpush1.msra.mxu0 0.0
        %623 = vmatprep.subr.mxu0 0.0
        %624 = vmatpush1.msra.mxu0 0.0
        %625 = vmatprep.subr.mxu0 0.0
        %626 = vmatpush1.msra.mxu0 0.0
        %627 = vmatprep.subr.mxu0 0.0
        %628 = vmatpush1.msra.mxu0 0.0
        %629 = vmatprep.subr.mxu0 0.0
        %630 = vmatpush1.msra.mxu0 0.0
        %631 = vmatprep.subr.mxu0 0.0
        %632 = vmatpush1.msra.mxu0 0.0
        %633 = vmatprep.subr.mxu0 0.0
        %634 = vmatpush1.msra.mxu0 0.0
        %635 = vmatprep.subr.mxu0 0.0
        %636 = vmatpush1.msra.mxu0 0.0
        %637 = vmatprep.subr.mxu0 0.0
        %638 = vmatpush1.msra.mxu0 0.0
        %639 = vmatprep.subr.mxu0 0.0
        %640 = vmatpush1.msra.mxu0 0.0
        %641 = vmatprep.subr.mxu0 0.0
        %642 = vmatpush1.msra.mxu0 0.0
        %643 = vmatprep.mubr.f32.mxu0 0.0
        %644 = vmatmul.mubr.f32.gmra.mrb[0].mxu0 %v574
        %v645 = vpop.f32.mrb[0].mxu0
        %v646 = vadd.f32 %v570, %v645
        %v647 = vpop.f32.mrb[0].mxu0
        %648 = vdwg.mxu0
        %v649 = vld [vmem:[%s4] sm:$0x1]
        %v650 = vadd.f32 %v646, %v649
        %v651 = vxor.u32 %v650, 2147483648
        %v652 = vmul.f32 %v651, 1.442695
        %v653 = vpow.pop %v652
        %v654 = vadd.f32 %v653, 1.0
        %v655 = vrcp.pop %v654
        %v656 = vmul.f32 1.0, %v655
        %v657 = vlaneseq
        %v658 = vshrl.u32 %v657, 7
        %v659 = vsub.s32 0, %v658
        %v660 = vrot.slane %v656, %v659
        %662 = vbcast.lane.b32.xlu0 %v660, 256
        %v663 = vpop.permute.xlu0 %662
        %s665 = sor.u32 256, 8
        %666 = vbcast.lane.b32.xlu0 %v660, %s665
        %v667 = vpop.permute.xlu0 %666
        %s669 = sor.u32 256, 16
        %670 = vbcast.lane.b32.xlu0 %v660, %s669
        %v671 = vpop.permute.xlu0 %670
        %s673 = sor.u32 256, 24
        %674 = vbcast.lane.b32.xlu0 %v660, %s673
        %v675 = vpop.permute.xlu0 %674
        %v676 = vmul.f32 %v243, %v663
        %v677 = vmul.f32 %v244, %v663
        %v678 = vmul.f32 %v245, %v667
        %v679 = vmul.f32 %v246, %v667
        %v680 = vmul.f32 %v247, %v671
        %v681 = vmul.f32 %v248, %v671
        %v682 = vmul.f32 %v249, %v675
        %v683 = vmul.f32 %v250, %v675
        %684 = vst [vmem:[%s242] sm:$0xff] %v676
        %685 = vst [vmem:[%s242 + $0x8] sm:$0xff] %v677
        %686 = vst [vmem:[%s242 + $0x10] sm:$0xff] %v678
        %687 = vst [vmem:[%s242 + $0x18] sm:$0xff] %v679
        %688 = vst [vmem:[%s242 + $0x20] sm:$0xff] %v680
        %689 = vst [vmem:[%s242 + $0x28] sm:$0xff] %v681
        %690 = vst [vmem:[%s242 + $0x30] sm:$0xff] %v682
        %691 = vst [vmem:[%s242 + $0x38] sm:$0xff] %v683
        %s692 = sand.u32 %s140, 1
        %s693 = scalar_lea.sflag [#allocation4], %s692
        %s694 = sand.u32 %s140, 1
        %s695 = smul.addr %s694, 64
        %s696 = scalar_lea.vmem [#allocation5], %s695
        // Predicated region
        $region45: #{tpu_custom_call.1} parent=39 // pred_check
          %p697 = pneg %p150
        $region46: #{tpu_custom_call.1} parent=39 // pred_check_branch
          %699 = sbr.rel (%p697) target = $region48
        $region47: #{tpu_custom_call.1} parent=39 // pred_region
          %s701 = ssub.s32 1024, 1024
          %702 = vsyncadd %s693, %s701
          %s703 = smul.addr %s22, 8
          %s704 = smul.addr %s703, 128
          %s705 = scalar_lea.hbm %s5, %s704
          %s706 = sshll.u32 %s696, 4
          %s707 = int_to_ptr.vmem [resolvable:$true] %s706
          %712 = dma.vmem_to_hbm [thread:$0]  %s707, 1024, %s705, %s693, 256, 256, 16
        $region48: #{tpu_custom_call.1} parent=39 // pred_fallthru
          _
      $region40: #{tpu_custom_call.1} parent=5 // pred_fallthru
        _
      %p713 = scmp.le.s32.totalorder 2, %s17
      // Predicated region
      $region49: #{tpu_custom_call.1} parent=5 // pred_check
        %p714 = pneg %p713
      $region50: #{tpu_custom_call.1} parent=5 // pred_check_branch
        %716 = sbr.rel (%p714) target = $region52
      $region51: #{tpu_custom_call.1} parent=5 // pred_region
        %s717 = ssub.s32 %s17, 2
        // Predicated region
        $region53: #{tpu_custom_call.1} parent=51 // pred_check
          %p718 = pneg %p156
        $region54: #{tpu_custom_call.1} parent=51 // pred_check_branch
          %720 = sbr.rel (%p718) target = $region56
        $region55: #{tpu_custom_call.1} parent=51 // pred_region
          %s721 = sand.u32 %s141, 1
          %s722 = scalar_lea.sflag [#allocation4], %s721
          %s723 = sand.u32 %s141, 1
          %s724 = smul.addr %s723, 64
          %s725 = scalar_lea.vmem [#allocation5], %s724
          %726 = dma.done %s722, 1024
        $region56: #{tpu_custom_call.1} parent=51 // pred_fallthru
          _
      $region52: #{tpu_custom_call.1} parent=5 // pred_fallthru
        _
    $region6: #{tpu_custom_call.1} parent=1 // loop_footer
      %s21 = sadd.s32 1, %s17
    $region7: #{tpu_custom_call.1} parent=1 // loop_footer_branch
      %16 = sbr.rel target = $region3
    $region8: #{tpu_custom_call.1} parent=1 // loop_exit
      _
    %727 = vsyncpa [#allocation3], 1
    %s728 = scalar_lea.sflag [#allocation3], 1
    %729 = vsyncpa %s728, 1
    %730 = vsyncpa [#allocation4], 1
    %s731 = scalar_lea.sflag [#allocation4], 1
    %732 = vsyncpa %s731, 1

</llo_original>
